<compile_context>
chip_gen: v5e
topology: v5e:2x2
jax: 0.10.0
libtpu: 0.0.40
codegen_flags: <defaults>
</compile_context>

<pallas_src>
import jax
import jax.numpy as jnp
from jax.experimental import pallas as pl
from jax.experimental.pallas import tpu as pltpu

HIDDEN = 128
LANE = 128
SUBLANE = 8


def _round_up(n, m):
    return (n + m - 1) // m * m


# ----------------------------- kernel ---------------------------------------
def qnet_kernel(x_ref, w1_ref, b1_ref, w2_ref, b2_ref, w3_ref, b3_ref, o_ref):
    # In-kernel cast of the activation tile (f32 -> bf16): couple of VPU pack
    # ops, avoids an extra wrapper-side HBM round trip over x.
    x = x_ref[...].astype(jnp.bfloat16)
    # fc1 + relu  (bf16 operands, f32 accumulation on the MXU)
    h1 = jnp.dot(x, w1_ref[...], preferred_element_type=jnp.float32)
    h1 = jnp.maximum(h1 + b1_ref[...], 0.0).astype(jnp.bfloat16)
    # fc2 + relu
    h2 = jnp.dot(h1, w2_ref[...], preferred_element_type=jnp.float32)
    h2 = jnp.maximum(h2 + b2_ref[...], 0.0).astype(jnp.bfloat16)
    # fc3 (no activation) -> padded, lane-dense action values stored as bf16
    out = jnp.dot(h2, w3_ref[...], preferred_element_type=jnp.float32)
    o_ref[...] = (out + b3_ref[...]).astype(o_ref.dtype)


# --------------------------- params / packing -------------------------------
def init_params(key, n_state, n_action, hidden=HIDDEN):
    """Unpadded f32 params mimicking nn.Linear's U(-1/sqrt(fan_in), 1/sqrt(fan_in)).
    Weights are stored transposed vs PyTorch: shape (in, out), so y = x @ W + b."""
    ks = jax.random.split(key, 6)

    def linear(kw, kb, fan_in, fan_out):
        bound = 1.0 / jnp.sqrt(jnp.float32(fan_in))
        w = jax.random.uniform(kw, (fan_in, fan_out), jnp.float32, -bound, bound)
        b = jax.random.uniform(kb, (1, fan_out), jnp.float32, -bound, bound)
        return w, b

    w1, b1 = linear(ks[0], ks[1], n_state, hidden)
    w2, b2 = linear(ks[2], ks[3], hidden, hidden)
    w3, b3 = linear(ks[4], ks[5], hidden, n_action)
    return dict(w1=w1, b1=b1, w2=w2, b2=b2, w3=w3, b3=b3)


def pack_params(p, n_state, n_action, hidden=HIDDEN):
    """Weights as bf16 (MXU operands), biases as f32.
    Only n_action is padded (to a multiple of 128) for lane-dense output stores;
    padded columns are zero so results are unchanged."""
    na_pad = _round_up(n_action, LANE)

    w1 = p["w1"].astype(jnp.bfloat16)                      # (n_state, 128)
    w2 = p["w2"].astype(jnp.bfloat16)                      # (128, 128)
    w3 = jnp.zeros((hidden, na_pad), jnp.bfloat16).at[:, :n_action].set(
        p["w3"].astype(jnp.bfloat16))                      # (128, na_pad)
    b1 = p["b1"].astype(jnp.float32)
    b2 = p["b2"].astype(jnp.float32)
    b3 = jnp.zeros((1, na_pad), jnp.float32).at[:, :n_action].set(
        p["b3"].astype(jnp.float32))
    return dict(w1=w1, b1=b1, w2=w2, b2=b2, w3=w3, b3=b3,
                n_state=n_state, n_action=n_action)


# ----------------------------- tile choice -----------------------------------
def _choose_tb(B, block_b):
    """Batch tile: multiple of 8 sublanes, padding bounded to < one tile, and
    >= 2 grid steps once B >= 16 so both v7x TensorCores get work."""
    block_b = max(SUBLANE, _round_up(block_b, SUBLANE))
    if B >= 2 * block_b:
        return block_b                      # block_b default is a multiple of 256
    if B >= 2 * SUBLANE:
        # Split the batch into (at least) two tiles.
        return min(block_b, _round_up(pl.cdiv(B, 2), SUBLANE))
    return max(SUBLANE, _round_up(B, SUBLANE))


# ------------------------------ wrapper --------------------------------------
def qnet_forward(x, packed, *, block_b=1024):
    """x: (B, n_state) f32. packed: output of pack_params. Returns (B, n_action) f32."""
    w1, b1 = packed["w1"], packed["b1"]
    w2, b2 = packed["w2"], packed["b2"]
    w3, b3 = packed["w3"], packed["b3"]
    n_action = packed["n_action"]

    B, n_state = x.shape
    hidden = w1.shape[1]
    na_pad = w3.shape[1]

    tb = _choose_tb(B, block_b)
    grid = (pl.cdiv(B, tb),)

    # Weights/biases stay resident in VMEM; block index never changes so a
    # single pipeline buffer suffices.
    def resident(a):
        return pl.BlockSpec(a.shape, lambda i: (0,) * a.ndim,
                            pipeline_mode=pl.Buffered(1))

    flops = 2 * B * (n_state * hidden + hidden * hidden + hidden * na_pad)
    bytes_accessed = (x.size * 4
                      + (w1.size + w2.size + w3.size) * 2
                      + (b1.size + b2.size + b3.size) * 4
                      + B * na_pad * 2)

    out_pad = pl.pallas_call(
        qnet_kernel,
        out_shape=jax.ShapeDtypeStruct((B, na_pad), jnp.bfloat16),
        grid=grid,
        in_specs=[
            pl.BlockSpec((tb, n_state), lambda i: (i, 0)),   # x: tiled over batch
            resident(w1), resident(b1),
            resident(w2), resident(b2),
            resident(w3), resident(b3),
        ],
        out_specs=pl.BlockSpec((tb, na_pad), lambda i: (i, 0)),
        compiler_params=pltpu.CompilerParams(
            dimension_semantics=("parallel",)),
        cost_estimate=pl.CostEstimate(
            flops=flops, transcendentals=0, bytes_accessed=bytes_accessed),
    )(x, w1, b1, w2, b2, w3, b3)

    # Slice off the padded action columns and give callers f32.
    return out_pad[:, :n_action].astype(jnp.float32)


# ----------------------------- references ------------------------------------
def qnet_ref_f32(x, p):
    h1 = jnp.maximum(x @ p["w1"] + p["b1"], 0.0)
    h2 = jnp.maximum(h1 @ p["w2"] + p["b2"], 0.0)
    return h2 @ p["w3"] + p["b3"]


def qnet_ref_bf16(x, p):
    """Same bf16-operand / f32-accumulate / bf16-store recipe as the kernel."""
    bf = lambda a: a.astype(jnp.bfloat16)
    h1 = jnp.dot(bf(x), bf(p["w1"]), preferred_element_type=jnp.float32) + p["b1"]
    h1 = jnp.maximum(h1, 0.0).astype(jnp.bfloat16)
    h2 = jnp.dot(h1, bf(p["w2"]), preferred_element_type=jnp.float32) + p["b2"]
    h2 = jnp.maximum(h2, 0.0).astype(jnp.bfloat16)
    out = jnp.dot(h2, bf(p["w3"]), preferred_element_type=jnp.float32) + p["b3"]
    return out.astype(jnp.bfloat16).astype(jnp.float32)


if __name__ == "__main__":
    key = jax.random.PRNGKey(0)
    k_param, k_x1, k_x2 = jax.random.split(key, 3)

    n_state, n_action = 4, 2
    params = init_params(k_param, n_state, n_action)
    packed = pack_params(params, n_state, n_action)

    # Small single-tile case (B=8 -> tb=8, grid=(1,)).
    B1 = 8
    x1 = jax.random.normal(k_x1, (B1, n_state), jnp.float32)
    out1 = jax.block_until_ready(qnet_forward(x1, packed))
    assert out1.shape == (B1, n_action), out1.shape
    assert jnp.allclose(out1, qnet_ref_bf16(x1, params), atol=2e-2, rtol=2e-2), \
        "mismatch vs bf16 reference (B=8)"
    assert jnp.allclose(out1, qnet_ref_f32(x1, params), atol=1e-1, rtol=5e-2), \
        "mismatch vs f32 reference (B=8)"

    # Multi-tile case with a ragged tail (B=20, block_b=16 -> tb=16, grid=(2,),
    # last block only 4 valid rows) exercising boundary clipping.
    B2 = 20
    x2 = jax.random.normal(k_x2, (B2, n_state), jnp.float32)
    out2 = jax.block_until_ready(qnet_forward(x2, packed, block_b=16))
    assert out2.shape == (B2, n_action), out2.shape
    assert jnp.allclose(out2, qnet_ref_bf16(x2, params), atol=2e-2, rtol=2e-2), \
        "mismatch vs bf16 reference (B=20, tiled + ragged tail)"

    print("KERNEL_OK")
</pallas_src>

<mosaic_0001>
module attributes {stable_mosaic.version = 11 : i64} {
  func.func @qnet_kernel(%arg0: i32, %arg1: memref<8x4xf32, #tpu.memory_space<vmem>>, %arg2: memref<4x128xbf16, #tpu.memory_space<vmem>>, %arg3: memref<1x128xf32, #tpu.memory_space<vmem>>, %arg4: memref<128x128xbf16, #tpu.memory_space<vmem>>, %arg5: memref<1x128xf32, #tpu.memory_space<vmem>>, %arg6: memref<128x128xbf16, #tpu.memory_space<vmem>>, %arg7: memref<1x128xf32, #tpu.memory_space<vmem>>, %arg8: memref<8x128xbf16, #tpu.memory_space<vmem>>) attributes {dimension_semantics = [#tpu.dimension_semantics<parallel>], iteration_bounds = array<i64: 1>, scalar_prefetch = 0 : i64, scratch_operands = 0 : i64, tpu.core_type = #tpu.core_type<tc>, window_params = [{transform_indices = @transform_0, window_bounds = array<i64: 8, 4>}, {pipeline_mode = #tpu.pipeline_mode<synchronous>, transform_indices = @transform_1, window_bounds = array<i64: 4, 128>}, {pipeline_mode = #tpu.pipeline_mode<synchronous>, transform_indices = @transform_2, window_bounds = array<i64: 1, 128>}, {pipeline_mode = #tpu.pipeline_mode<synchronous>, transform_indices = @transform_3, window_bounds = array<i64: 128, 128>}, {pipeline_mode = #tpu.pipeline_mode<synchronous>, transform_indices = @transform_4, window_bounds = array<i64: 1, 128>}, {pipeline_mode = #tpu.pipeline_mode<synchronous>, transform_indices = @transform_5, window_bounds = array<i64: 128, 128>}, {pipeline_mode = #tpu.pipeline_mode<synchronous>, transform_indices = @transform_6, window_bounds = array<i64: 1, 128>}, {transform_indices = @transform_7, window_bounds = array<i64: 8, 128>}]} {
    %c0 = arith.constant 0 : index
    %c0_0 = arith.constant 0 : index
    %0 = vector.load %arg1[%c0, %c0_0] : memref<8x4xf32, #tpu.memory_space<vmem>>, vector<8x4xf32>
    %1 = arith.truncf %0 : vector<8x4xf32> to vector<8x4xbf16>
    %c0_1 = arith.constant 0 : index
    %c0_2 = arith.constant 0 : index
    %2 = vector.load %arg2[%c0_1, %c0_2] : memref<4x128xbf16, #tpu.memory_space<vmem>>, vector<4x128xbf16>
    %cst = arith.constant dense<0.000000e+00> : vector<8x128xf32>
    %3 = tpu.matmul %1, %2, %cst {dimension_numbers = #tpu.dot_dimension_numbers<[1], [0], [0], [1], [0, 0, 1, 1], [], []>} : vector<8x4xbf16>, vector<4x128xbf16>, vector<8x128xf32> -> vector<8x128xf32>
    %c0_3 = arith.constant 0 : index
    %c0_4 = arith.constant 0 : index
    %4 = vector.load %arg3[%c0_3, %c0_4] : memref<1x128xf32, #tpu.memory_space<vmem>>, vector<1x128xf32>
    %5 = vector.broadcast %4 : vector<1x128xf32> to vector<8x128xf32>
    %6 = arith.addf %3, %5 : vector<8x128xf32>
    %cst_5 = arith.constant 0.000000e+00 : f32
    %7 = vector.broadcast %cst_5 : f32 to vector<8x128xf32>
    %8 = arith.maximumf %6, %7 : vector<8x128xf32>
    %9 = arith.truncf %8 : vector<8x128xf32> to vector<8x128xbf16>
    %c0_6 = arith.constant 0 : index
    %c0_7 = arith.constant 0 : index
    %10 = vector.load %arg4[%c0_6, %c0_7] : memref<128x128xbf16, #tpu.memory_space<vmem>>, vector<128x128xbf16>
    %cst_8 = arith.constant dense<0.000000e+00> : vector<8x128xf32>
    %11 = tpu.matmul %9, %10, %cst_8 {dimension_numbers = #tpu.dot_dimension_numbers<[1], [0], [0], [1], [0, 0, 1, 1], [], []>} : vector<8x128xbf16>, vector<128x128xbf16>, vector<8x128xf32> -> vector<8x128xf32>
    %c0_9 = arith.constant 0 : index
    %c0_10 = arith.constant 0 : index
    %12 = vector.load %arg5[%c0_9, %c0_10] : memref<1x128xf32, #tpu.memory_space<vmem>>, vector<1x128xf32>
    %13 = vector.broadcast %12 : vector<1x128xf32> to vector<8x128xf32>
    %14 = arith.addf %11, %13 : vector<8x128xf32>
    %cst_11 = arith.constant 0.000000e+00 : f32
    %15 = vector.broadcast %cst_11 : f32 to vector<8x128xf32>
    %16 = arith.maximumf %14, %15 : vector<8x128xf32>
    %17 = arith.truncf %16 : vector<8x128xf32> to vector<8x128xbf16>
    %c0_12 = arith.constant 0 : index
    %c0_13 = arith.constant 0 : index
    %18 = vector.load %arg6[%c0_12, %c0_13] : memref<128x128xbf16, #tpu.memory_space<vmem>>, vector<128x128xbf16>
    %cst_14 = arith.constant dense<0.000000e+00> : vector<8x128xf32>
    %19 = tpu.matmul %17, %18, %cst_14 {dimension_numbers = #tpu.dot_dimension_numbers<[1], [0], [0], [1], [0, 0, 1, 1], [], []>} : vector<8x128xbf16>, vector<128x128xbf16>, vector<8x128xf32> -> vector<8x128xf32>
    %c0_15 = arith.constant 0 : index
    %c0_16 = arith.constant 0 : index
    %20 = vector.load %arg7[%c0_15, %c0_16] : memref<1x128xf32, #tpu.memory_space<vmem>>, vector<1x128xf32>
    %21 = vector.broadcast %20 : vector<1x128xf32> to vector<8x128xf32>
    %22 = arith.addf %19, %21 : vector<8x128xf32>
    %23 = arith.truncf %22 : vector<8x128xf32> to vector<8x128xbf16>
    %c0_17 = arith.constant 0 : index
    %c0_18 = arith.constant 0 : index
    %24 = vector.load %arg8[%c0_17, %c0_18] : memref<8x128xbf16, #tpu.memory_space<vmem>>, vector<8x128xbf16>
    tpu.vector_store %arg8[%c0_17, %c0_18], %23 {strides = array<i32>} : memref<8x128xbf16, #tpu.memory_space<vmem>>, vector<8x128xbf16>,
    return
  }
  func.func @transform_0(%arg0: i32) -> (i32, i32) {
    %c0_i32 = arith.constant 0 : i32
    %c0_i32_0 = arith.constant 0 : i32
    return %arg0, %c0_i32 : i32, i32
  }
  func.func @transform_1(%arg0: i32) -> (i32, i32) {
    %c0_i32 = arith.constant 0 : i32
    %c0_i32_0 = arith.constant 0 : i32
    %c0_i32_1 = arith.constant 0 : i32
    return %c0_i32, %c0_i32_0 : i32, i32
  }
  func.func @transform_2(%arg0: i32) -> (i32, i32) {
    %c0_i32 = arith.constant 0 : i32
    %c0_i32_0 = arith.constant 0 : i32
    %c0_i32_1 = arith.constant 0 : i32
    return %c0_i32, %c0_i32_0 : i32, i32
  }
  func.func @transform_3(%arg0: i32) -> (i32, i32) {
    %c0_i32 = arith.constant 0 : i32
    %c0_i32_0 = arith.constant 0 : i32
    %c0_i32_1 = arith.constant 0 : i32
    return %c0_i32, %c0_i32_0 : i32, i32
  }
  func.func @transform_4(%arg0: i32) -> (i32, i32) {
    %c0_i32 = arith.constant 0 : i32
    %c0_i32_0 = arith.constant 0 : i32
    %c0_i32_1 = arith.constant 0 : i32
    return %c0_i32, %c0_i32_0 : i32, i32
  }
  func.func @transform_5(%arg0: i32) -> (i32, i32) {
    %c0_i32 = arith.constant 0 : i32
    %c0_i32_0 = arith.constant 0 : i32
    %c0_i32_1 = arith.constant 0 : i32
    return %c0_i32, %c0_i32_0 : i32, i32
  }
  func.func @transform_6(%arg0: i32) -> (i32, i32) {
    %c0_i32 = arith.constant 0 : i32
    %c0_i32_0 = arith.constant 0 : i32
    %c0_i32_1 = arith.constant 0 : i32
    return %c0_i32, %c0_i32_0 : i32, i32
  }
  func.func @transform_7(%arg0: i32) -> (i32, i32) {
    %c0_i32 = arith.constant 0 : i32
    %c0_i32_0 = arith.constant 0 : i32
    return %arg0, %c0_i32 : i32, i32
  }
}

</mosaic_0001>

<llo_original>
// kernel: tpu_custom_call.1
$region0: #{tpu_custom_call.1}
  #allocation0 [shape = 'u32[]', space=smem, size = 0x4, offset = 0x4, fixed_abs, tag = 'smem constant byte address 0x4 - core index']
  #allocation1 [shape = 'u32[72,128]{1,0:T(1,128)}', space=vmem, size = 0x9000, scoped, tag = 'internal scratch']
  %s0 = inlined_call_operand.vmem [shape: f32[8,4], index: 0, kind: input, shape index: {}]
  %s1 = inlined_call_operand.vmem [shape: bf16[4,128], index: 1, kind: input, shape index: {}]
  %s2 = inlined_call_operand.vmem [shape: f32[1,128], index: 2, kind: input, shape index: {}]
  %s3 = inlined_call_operand.hbm [shape: bf16[128,128], index: 3, kind: input, shape index: {}]
  %s4 = inlined_call_operand.vmem [shape: f32[1,128], index: 4, kind: input, shape index: {}]
  %s5 = inlined_call_operand.hbm [shape: bf16[128,128], index: 5, kind: input, shape index: {}]
  %s6 = inlined_call_operand.vmem [shape: f32[1,128], index: 6, kind: input, shape index: {}]
  %s7 = inlined_call_operand.hbm [shape: bf16[8,128], index: 7, kind: output, shape index: {}]
  %s8 = sld [smem:[#allocation0]]
  $region46: #{tpu_custom_call.1} parent=0
    _
  %s10 = ssub.s32 1, %s8
  %s11 = scalar_select 0, %s10, %s8
  $region1: #{tpu_custom_call.1} parent=0
    #allocation2 [shape = 'u8[32768]{0}', space=vmem, size = 0x8000, scoped, tag = 'input window, operand 3, single buffered']
    #allocation3 [shape = 's32[1]{0}', space=sflag, size = 0x4, scoped, tag = 'scoped memory for tpu_custom_call.1']
    #allocation4 [shape = 's32[1]{0}', space=sflag, size = 0x4, scoped, tag = 'scoped memory for tpu_custom_call.1']
    #allocation5 [shape = 'u8[32768]{0}', space=vmem, size = 0x8000, scoped, tag = 'input window, operand 5, single buffered']
    #allocation6 [shape = 's32[1]{0}', space=sflag, size = 0x4, scoped, tag = 'scoped memory for tpu_custom_call.1']
    #allocation7 [shape = 'u8[2048]{0}', space=vmem, size = 0x800, scoped, tag = 'output window, operand 0, single buffered']
    %12 = vsyncpa [#allocation3], 0
    %13 = vsyncpa [#allocation6], 0
    %14 = vsyncpa [#allocation4], 0
    // Predicated region
    $region2: #{tpu_custom_call.1} parent=1 // pred_check
      _
    $region3: #{tpu_custom_call.1} parent=1 // pred_check_branch
      %16 = sbr.rel (0) target = $region5
    $region4: #{tpu_custom_call.1} parent=1 // pred_region
      _
    $region5: #{tpu_custom_call.1} parent=1 // pred_fallthru
      _
    // Predicated region
    $region6: #{tpu_custom_call.1} parent=1 // pred_check
      _
    $region7: #{tpu_custom_call.1} parent=1 // pred_check_branch
      %18 = sbr.rel (0) target = $region9
    $region8: #{tpu_custom_call.1} parent=1 // pred_region
      _
    $region9: #{tpu_custom_call.1} parent=1 // pred_fallthru
      _
    // Predicated region
    $region10: #{tpu_custom_call.1} parent=1 // pred_check
      _
    $region11: #{tpu_custom_call.1} parent=1 // pred_check_branch
      %20 = sbr.rel (0) target = $region13
    $region12: #{tpu_custom_call.1} parent=1 // pred_region
      _
    $region13: #{tpu_custom_call.1} parent=1 // pred_fallthru
      _
    // Predicated region
    $region14: #{tpu_custom_call.1} parent=1 // pred_check
      _
    $region15: #{tpu_custom_call.1} parent=1 // pred_check_branch
      %22 = sbr.rel (0) target = $region17
    $region16: #{tpu_custom_call.1} parent=1 // pred_region
      %24 = vsyncadd [#allocation3], 0
      %s25 = sshll.u32 %s3, 4
      %s26 = int_to_ptr.hbm [resolvable:$true] %s25
      %s27 = sshll.u32 [#allocation2], 4
      %s28 = int_to_ptr.vmem [resolvable:$true] %s27
      %33 = dma.hbm_to_vmem [thread:$0]  %s26, 1024, %s28, [#allocation3], 64, 64, 4
    $region17: #{tpu_custom_call.1} parent=1 // pred_fallthru
      _
    // Predicated region
    $region18: #{tpu_custom_call.1} parent=1 // pred_check
      _
    $region19: #{tpu_custom_call.1} parent=1 // pred_check_branch
      %35 = sbr.rel (0) target = $region21
    $region20: #{tpu_custom_call.1} parent=1 // pred_region
      _
    $region21: #{tpu_custom_call.1} parent=1 // pred_fallthru
      _
    // Predicated region
    $region22: #{tpu_custom_call.1} parent=1 // pred_check
      _
    $region23: #{tpu_custom_call.1} parent=1 // pred_check_branch
      %37 = sbr.rel (0) target = $region25
    $region24: #{tpu_custom_call.1} parent=1 // pred_region
      %39 = vsyncadd [#allocation6], 0
      %s40 = sshll.u32 %s5, 4
      %s41 = int_to_ptr.hbm [resolvable:$true] %s40
      %s42 = sshll.u32 [#allocation5], 4
      %s43 = int_to_ptr.vmem [resolvable:$true] %s42
      %48 = dma.hbm_to_vmem [thread:$0]  %s41, 1024, %s43, [#allocation6], 64, 64, 4
    $region25: #{tpu_custom_call.1} parent=1 // pred_fallthru
      _
    // Predicated region
    $region26: #{tpu_custom_call.1} parent=1 // pred_check
      _
    $region27: #{tpu_custom_call.1} parent=1 // pred_check_branch
      %50 = sbr.rel (0) target = $region29
    $region28: #{tpu_custom_call.1} parent=1 // pred_region
      _
    $region29: #{tpu_custom_call.1} parent=1 // pred_fallthru
      _
    // Predicated region
    $region30: #{tpu_custom_call.1} parent=1 // pred_check
      _
    $region31: #{tpu_custom_call.1} parent=1 // pred_check_branch
      %52 = sbr.rel (0) target = $region33
    $region32: #{tpu_custom_call.1} parent=1 // pred_region
      %54 = dma.done [#allocation3], 1024
    $region33: #{tpu_custom_call.1} parent=1 // pred_fallthru
      _
    // Predicated region
    $region34: #{tpu_custom_call.1} parent=1 // pred_check
      _
    $region35: #{tpu_custom_call.1} parent=1 // pred_check_branch
      %56 = sbr.rel (0) target = $region37
    $region36: #{tpu_custom_call.1} parent=1 // pred_region
      %58 = dma.done [#allocation6], 1024
    $region37: #{tpu_custom_call.1} parent=1 // pred_fallthru
      _
    %v60 = vld [vmem:[%s0] sm:$0xff]
    %v61 = vpack.c.bf16 %v60, %v60
    %v62 = vld [vmem:[%s1] sm:$0x3]
    %v63 = vld [vmem:[%s2] sm:$0x1]
    %v65 = vperm.slane %v63, 0
    %vm67 = vcmask 31744
    %v69 = vsel %vm67, %v61, 0
    %vm71 = vcmask 1041408
    %v73 = vsel %vm71, %v62, 0
    %75 = vmatpush.bf16.msra.mxu0 0
    %76 = vmatpush.bf16.msra.mxu0 0
    %77 = vmatpush.bf16.msra.mxu0 0
    %78 = vmatpush.bf16.msra.mxu0 0
    %79 = vmatpush.bf16.msra.mxu0 0
    %80 = vmatpush.bf16.msra.mxu0 0
    %81 = vmatpush.bf16.msra.mxu0 0
    %82 = vmatpush.bf16.msra.mxu0 %v73
    %83 = vmatmul.bf16.gmra.mxu0 %v69
    %v84 = vpop.f32.mrf.mxu0
    %v85 = vadd.f32 %v65, %v84
    %v86 = vpop.f32.mrf.mxu0
    %87 = vdwg.mxu0
    %v88 = vmax.f32 %v85, 0.0
    %v89 = vpack.c.bf16 %v88, %v88
    %v90 = vld [vmem:[#allocation2] sm:$0xf]
    %v91 = vld [vmem:[#allocation2 + $0x4] sm:$0xf]
    %v92 = vld [vmem:[#allocation2 + $0x8] sm:$0xf]
    %v93 = vld [vmem:[#allocation2 + $0xc] sm:$0xf]
    %v94 = vld [vmem:[#allocation2 + $0x10] sm:$0xf]
    %v95 = vld [vmem:[#allocation2 + $0x14] sm:$0xf]
    %v96 = vld [vmem:[#allocation2 + $0x18] sm:$0xf]
    %v97 = vld [vmem:[#allocation2 + $0x1c] sm:$0xf]
    %v98 = vld [vmem:[#allocation2 + $0x20] sm:$0xf]
    %v99 = vld [vmem:[#allocation2 + $0x24] sm:$0xf]
    %v100 = vld [vmem:[#allocation2 + $0x28] sm:$0xf]
    %v101 = vld [vmem:[#allocation2 + $0x2c] sm:$0xf]
    %v102 = vld [vmem:[#allocation2 + $0x30] sm:$0xf]
    %v103 = vld [vmem:[#allocation2 + $0x34] sm:$0xf]
    %v104 = vld [vmem:[#allocation2 + $0x38] sm:$0xf]
    %v105 = vld [vmem:[#allocation2 + $0x3c] sm:$0xf]
    %v106 = vld [vmem:[%s4] sm:$0x1]
    %v108 = vperm.slane %v106, 0
    %v126 = vunpack.c.l.b16 %v90
    %v127 = vunpack.c.l.b16 %v91
    %v128 = vunpack.c.l.b16 %v92
    %v129 = vunpack.c.l.b16 %v93
    %v130 = vunpack.c.l.b16 %v94
    %v131 = vunpack.c.l.b16 %v95
    %v132 = vunpack.c.l.b16 %v96
    %v133 = vunpack.c.l.b16 %v97
    %v134 = vunpack.c.l.b16 %v98
    %v135 = vunpack.c.l.b16 %v99
    %v136 = vunpack.c.l.b16 %v100
    %v137 = vunpack.c.l.b16 %v101
    %v138 = vunpack.c.l.b16 %v102
    %v139 = vunpack.c.l.b16 %v103
    %v140 = vunpack.c.l.b16 %v104
    %v141 = vunpack.c.l.b16 %v105
    %v142 = vpack.c.b16 %v127, %v126
    %v143 = vpack.c.b16 %v129, %v128
    %v144 = vpack.c.b16 %v131, %v130
    %v145 = vpack.c.b16 %v133, %v132
    %v146 = vpack.c.b16 %v135, %v134
    %v147 = vpack.c.b16 %v137, %v136
    %v148 = vpack.c.b16 %v139, %v138
    %v149 = vpack.c.b16 %v141, %v140
    %158 = vmatpush.bf16.msra.mxu0 %v149
    %159 = vmatpush.bf16.msra.mxu0 %v148
    %160 = vmatpush.bf16.msra.mxu0 %v147
    %161 = vmatpush.bf16.msra.mxu0 %v146
    %162 = vmatpush.bf16.msra.mxu0 %v145
    %163 = vmatpush.bf16.msra.mxu0 %v144
    %164 = vmatpush.bf16.msra.mxu0 %v143
    %165 = vmatpush.bf16.msra.mxu0 %v142
    %166 = vmatmul.bf16.gmra.mxu0 %v89
    %v167 = vpop.f32.mrf.mxu0
    %v168 = vadd.f32 %v108, %v167
    %v169 = vpop.f32.mrf.mxu0
    %170 = vdwg.mxu0
    %v171 = vmax.f32 %v168, 0.0
    %v172 = vpack.c.bf16 %v171, %v171
    %v173 = vld [vmem:[#allocation5] sm:$0xf]
    %v174 = vld [vmem:[#allocation5 + $0x4] sm:$0xf]
    %v175 = vld [vmem:[#allocation5 + $0x8] sm:$0xf]
    %v176 = vld [vmem:[#allocation5 + $0xc] sm:$0xf]
    %v177 = vld [vmem:[#allocation5 + $0x10] sm:$0xf]
    %v178 = vld [vmem:[#allocation5 + $0x14] sm:$0xf]
    %v179 = vld [vmem:[#allocation5 + $0x18] sm:$0xf]
    %v180 = vld [vmem:[#allocation5 + $0x1c] sm:$0xf]
    %v181 = vld [vmem:[#allocation5 + $0x20] sm:$0xf]
    %v182 = vld [vmem:[#allocation5 + $0x24] sm:$0xf]
    %v183 = vld [vmem:[#allocation5 + $0x28] sm:$0xf]
    %v184 = vld [vmem:[#allocation5 + $0x2c] sm:$0xf]
    %v185 = vld [vmem:[#allocation5 + $0x30] sm:$0xf]
    %v186 = vld [vmem:[#allocation5 + $0x34] sm:$0xf]
    %v187 = vld [vmem:[#allocation5 + $0x38] sm:$0xf]
    %v188 = vld [vmem:[#allocation5 + $0x3c] sm:$0xf]
    %v189 = vld [vmem:[%s6] sm:$0x1]
    %v191 = vperm.slane %v189, 0
    %v209 = vunpack.c.l.b16 %v173
    %v210 = vunpack.c.l.b16 %v174
    %v211 = vunpack.c.l.b16 %v175
    %v212 = vunpack.c.l.b16 %v176
    %v213 = vunpack.c.l.b16 %v177
    %v214 = vunpack.c.l.b16 %v178
    %v215 = vunpack.c.l.b16 %v179
    %v216 = vunpack.c.l.b16 %v180
    %v217 = vunpack.c.l.b16 %v181
    %v218 = vunpack.c.l.b16 %v182
    %v219 = vunpack.c.l.b16 %v183
    %v220 = vunpack.c.l.b16 %v184
    %v221 = vunpack.c.l.b16 %v185
    %v222 = vunpack.c.l.b16 %v186
    %v223 = vunpack.c.l.b16 %v187
    %v224 = vunpack.c.l.b16 %v188
    %v225 = vpack.c.b16 %v210, %v209
    %v226 = vpack.c.b16 %v212, %v211
    %v227 = vpack.c.b16 %v214, %v213
    %v228 = vpack.c.b16 %v216, %v215
    %v229 = vpack.c.b16 %v218, %v217
    %v230 = vpack.c.b16 %v220, %v219
    %v231 = vpack.c.b16 %v222, %v221
    %v232 = vpack.c.b16 %v224, %v223
    %241 = vmatpush.bf16.msra.mxu0 %v232
    %242 = vmatpush.bf16.msra.mxu0 %v231
    %243 = vmatpush.bf16.msra.mxu0 %v230
    %244 = vmatpush.bf16.msra.mxu0 %v229
    %245 = vmatpush.bf16.msra.mxu0 %v228
    %246 = vmatpush.bf16.msra.mxu0 %v227
    %247 = vmatpush.bf16.msra.mxu0 %v226
    %248 = vmatpush.bf16.msra.mxu0 %v225
    %249 = vmatmul.bf16.gmra.mxu0 %v172
    %v250 = vpop.f32.mrf.mxu0
    %v251 = vadd.f32 %v191, %v250
    %v252 = vpop.f32.mrf.mxu0
    %253 = vdwg.mxu0
    %v254 = vpack.c.bf16 %v251, %v251
    %255 = vst [vmem:[#allocation7] sm:$0xf] %v254
    // Predicated region
    $region38: #{tpu_custom_call.1} parent=1 // pred_check
      _
    $region39: #{tpu_custom_call.1} parent=1 // pred_check_branch
      %257 = sbr.rel (0) target = $region41
    $region40: #{tpu_custom_call.1} parent=1 // pred_region
      %259 = vsyncadd [#allocation4], 0
      %s261 = sshll.u32 [#allocation7], 4
      %s262 = int_to_ptr.vmem [resolvable:$true] %s261
      %s263 = sshll.u32 %s7, 4
      %s264 = int_to_ptr.hbm [resolvable:$true] %s263
      %266 = dma.vmem_to_hbm [thread:$0]  %s262, 64, %s264, [#allocation4]
    $region41: #{tpu_custom_call.1} parent=1 // pred_fallthru
      _
    // Predicated region
    $region42: #{tpu_custom_call.1} parent=1 // pred_check
      _
    $region43: #{tpu_custom_call.1} parent=1 // pred_check_branch
      %268 = sbr.rel (0) target = $region45
    $region44: #{tpu_custom_call.1} parent=1 // pred_region
      %270 = dma.done [#allocation4], 64
    $region45: #{tpu_custom_call.1} parent=1 // pred_fallthru
      _
    %271 = vsyncpa [#allocation3], 1
    %272 = vsyncpa [#allocation6], 1
    %273 = vsyncpa [#allocation4], 1

</llo_original>
